<compile_context>
chip_gen: v5e
topology: v5e:2x2
jax: 0.10.0
libtpu: 0.0.40
codegen_flags: <defaults>
</compile_context>

<pallas_src>
import jax
import jax.numpy as jnp
from jax.experimental import pallas as pl
from jax.experimental.pallas import tpu as pltpu

LANE = 128  # vreg lane width


def _round_up(n, m):
    return ((n + m - 1) // m) * m


def _cdiv(a, b):
    return -(-a // b)


def _effectgen_kernel(noise_ref, a_ref, w1a_ref, w1b_ref, b1_ref,
                      w2_ref, b2_ref, w3_ref, b3_ref, out_ref):
    # Layer 1: concat folded into a split matmul (two small MXU pushes), bias,
    # ReLU. All accumulation in f32.
    h1 = (jnp.dot(noise_ref[...], w1a_ref[...],
                  preferred_element_type=jnp.float32)
          + jnp.dot(a_ref[...], w1b_ref[...],
                    preferred_element_type=jnp.float32)
          + b1_ref[...])
    h1 = jnp.maximum(h1, 0.0)

    # Layer 2: Linear + ReLU (128-lane padded hidden, weights VMEM-resident).
    h2 = jnp.dot(h1, w2_ref[...],
                 preferred_element_type=jnp.float32) + b2_ref[...]
    h2 = jnp.maximum(h2, 0.0)

    # Layer 3: Linear, z_dim-wide output store (no 128-lane inflation).
    out = jnp.dot(h2, w3_ref[...],
                  preferred_element_type=jnp.float32) + b3_ref[...]
    out_ref[...] = out.astype(out_ref.dtype)


def prepare_params(params, noise_dim):
    """One-time static prep (call once, reuse across forwards).

    Splits w1 at the concat boundary and zero-pads the hidden dim to 128
    lanes. Zero padding is exact: ReLU(0)=0 and padded rows/cols contribute 0.
    """
    H = params["w2"].shape[0]
    z_dim = params["w3"].shape[1]
    h_pad = _round_up(H, LANE)
    dh = h_pad - H
    w1 = params["w1"]
    return {
        "noise_dim": noise_dim,
        "z_dim": z_dim,
        "w1a": jnp.pad(w1[:noise_dim], ((0, 0), (0, dh))),
        "w1b": jnp.pad(w1[noise_dim:], ((0, 0), (0, dh))),
        "b1": jnp.pad(params["b1"], (0, dh))[None, :],
        "w2": jnp.pad(params["w2"], ((0, dh), (0, dh))),
        "b2": jnp.pad(params["b2"], (0, dh))[None, :],
        "w3": jnp.pad(params["w3"], ((0, dh), (0, 0))),
        "b3": params["b3"][None, :],
    }


def effect_gen_forward(noise, a_emb, prepped, *, block_batch=2048):
    """Pallas implementation of EffectGen.forward.

    noise  : [B, noise_dim] float32
    a_emb  : [B, a_dim]     float32
    prepped: output of prepare_params()
    returns [B, z_dim] float32
    """
    B, noise_dim = noise.shape
    a_dim = a_emb.shape[1]
    z_dim = prepped["z_dim"]
    h_pad = prepped["w2"].shape[0]

    # Batch tiling: size the tile to the batch (minimal padding waste), keep
    # the grid at >=2 parallel steps when B is not tiny so v7x's two
    # TensorCores both get work. tb is a multiple of 8 and <= block_batch.
    n_tiles = max(1, _cdiv(B, block_batch))
    if n_tiles == 1 and B > 8:
        n_tiles = 2
    tb = _round_up(_cdiv(B, n_tiles), 8)
    b_pad = tb * n_tiles

    if b_pad != B:
        noise = jnp.pad(noise, ((0, b_pad - B), (0, 0)))
        a_emb = jnp.pad(a_emb, ((0, b_pad - B), (0, 0)))

    out = pl.pallas_call(
        _effectgen_kernel,
        out_shape=jax.ShapeDtypeStruct((b_pad, z_dim), jnp.float32),
        grid_spec=pltpu.PrefetchScalarGridSpec(
            num_scalar_prefetch=0,
            grid=(n_tiles,),
            in_specs=[
                # Activations: tiled over the batch axis.
                pl.BlockSpec((tb, noise_dim), lambda i: (i, 0)),
                pl.BlockSpec((tb, a_dim), lambda i: (i, 0)),
                # Weights / biases: same block every step -> VMEM-resident.
                pl.BlockSpec((noise_dim, h_pad), lambda i: (0, 0)),
                pl.BlockSpec((a_dim, h_pad), lambda i: (0, 0)),
                pl.BlockSpec((1, h_pad), lambda i: (0, 0)),
                pl.BlockSpec((h_pad, h_pad), lambda i: (0, 0)),
                pl.BlockSpec((1, h_pad), lambda i: (0, 0)),
                pl.BlockSpec((h_pad, z_dim), lambda i: (0, 0)),
                pl.BlockSpec((1, z_dim), lambda i: (0, 0)),
            ],
            out_specs=pl.BlockSpec((tb, z_dim), lambda i: (i, 0)),
        ),
        compiler_params=pltpu.CompilerParams(
            dimension_semantics=("parallel",)),
    )(noise, a_emb, prepped["w1a"], prepped["w1b"], prepped["b1"],
      prepped["w2"], prepped["b2"], prepped["w3"], prepped["b3"])

    # Strip batch padding (lane dim is already exactly z_dim).
    return out if b_pad == B else out[:B]


def init_params(key, z_dim, a_dim, noise_dim, hidden_dim=32):
    """Deterministic synthetic init (same shapes as the PyTorch module)."""
    ks = jax.random.split(key, 6)
    in_dim = noise_dim + a_dim

    def lin(kw, kb, fan_in, fan_out):
        bound = 1.0 / jnp.sqrt(fan_in)
        w = jax.random.uniform(kw, (fan_in, fan_out), jnp.float32, -bound, bound)
        b = jax.random.uniform(kb, (fan_out,), jnp.float32, -bound, bound)
        return w, b

    w1, b1 = lin(ks[0], ks[1], in_dim, hidden_dim)
    w2, b2 = lin(ks[2], ks[3], hidden_dim, hidden_dim)
    w3, b3 = lin(ks[4], ks[5], hidden_dim, z_dim)
    return {"w1": w1, "b1": b1, "w2": w2, "b2": b2, "w3": w3, "b3": b3}


def _reference(noise, a_emb, p):
    x = jnp.concatenate([noise, a_emb], axis=-1)
    h = jax.nn.relu(x @ p["w1"] + p["b1"])
    h = jax.nn.relu(h @ p["w2"] + p["b2"])
    return h @ p["w3"] + p["b3"]


if __name__ == "__main__":
    z_dim, a_dim, noise_dim, hidden_dim = 16, 8, 8, 32

    key = jax.random.PRNGKey(0)
    k_noise, k_a, k_params, k_noise2, k_a2 = jax.random.split(key, 5)
    params = init_params(k_params, z_dim, a_dim, noise_dim, hidden_dim)
    prepped = prepare_params(params, noise_dim)  # one-time static prep

    # Small-batch check (single grid step).
    batch = 8
    noise = jax.random.normal(k_noise, (batch, noise_dim), jnp.float32)
    a_emb = jax.random.normal(k_a, (batch, a_dim), jnp.float32)
    out = jax.block_until_ready(effect_gen_forward(noise, a_emb, prepped))
    ref = _reference(noise, a_emb, params)
    assert out.shape == (batch, z_dim)
    assert jnp.allclose(out, ref, atol=1e-5, rtol=1e-5), "mismatch vs reference (B=8)"

    # Larger batch: exercises the 2-step parallel grid and remainder padding
    # (B=300 -> tb=152, b_pad=304: only 4 garbage rows instead of 212).
    batch2 = 300
    noise2 = jax.random.normal(k_noise2, (batch2, noise_dim), jnp.float32)
    a_emb2 = jax.random.normal(k_a2, (batch2, a_dim), jnp.float32)
    out2 = jax.block_until_ready(effect_gen_forward(noise2, a_emb2, prepped))
    ref2 = _reference(noise2, a_emb2, params)
    assert out2.shape == (batch2, z_dim)
    assert jnp.allclose(out2, ref2, atol=1e-5, rtol=1e-5), "mismatch vs reference (B=300)"

    print("KERNEL_OK")
</pallas_src>

<mosaic_0001>
module attributes {stable_mosaic.version = 11 : i64} {
  func.func @_effectgen_kernel(%arg0: i32, %arg1: memref<8x8xf32, #tpu.memory_space<vmem>>, %arg2: memref<8x8xf32, #tpu.memory_space<vmem>>, %arg3: memref<8x128xf32, #tpu.memory_space<vmem>>, %arg4: memref<8x128xf32, #tpu.memory_space<vmem>>, %arg5: memref<1x128xf32, #tpu.memory_space<vmem>>, %arg6: memref<128x128xf32, #tpu.memory_space<vmem>>, %arg7: memref<1x128xf32, #tpu.memory_space<vmem>>, %arg8: memref<128x16xf32, #tpu.memory_space<vmem>>, %arg9: memref<1x16xf32, #tpu.memory_space<vmem>>, %arg10: memref<8x16xf32, #tpu.memory_space<vmem>>) attributes {dimension_semantics = [#tpu.dimension_semantics<parallel>], iteration_bounds = array<i64: 1>, scalar_prefetch = 0 : i64, scratch_operands = 0 : i64, tpu.core_type = #tpu.core_type<tc>, window_params = [{transform_indices = @transform_0, window_bounds = array<i64: 8, 8>}, {transform_indices = @transform_1, window_bounds = array<i64: 8, 8>}, {pipeline_mode = #tpu.pipeline_mode<synchronous>, transform_indices = @transform_2, window_bounds = array<i64: 8, 128>}, {pipeline_mode = #tpu.pipeline_mode<synchronous>, transform_indices = @transform_3, window_bounds = array<i64: 8, 128>}, {pipeline_mode = #tpu.pipeline_mode<synchronous>, transform_indices = @transform_4, window_bounds = array<i64: 1, 128>}, {pipeline_mode = #tpu.pipeline_mode<synchronous>, transform_indices = @transform_5, window_bounds = array<i64: 128, 128>}, {pipeline_mode = #tpu.pipeline_mode<synchronous>, transform_indices = @transform_6, window_bounds = array<i64: 1, 128>}, {pipeline_mode = #tpu.pipeline_mode<synchronous>, transform_indices = @transform_7, window_bounds = array<i64: 128, 16>}, {pipeline_mode = #tpu.pipeline_mode<synchronous>, transform_indices = @transform_8, window_bounds = array<i64: 1, 16>}, {transform_indices = @transform_9, window_bounds = array<i64: 8, 16>}]} {
    %c0 = arith.constant 0 : index
    %c0_0 = arith.constant 0 : index
    %0 = vector.load %arg1[%c0, %c0_0] : memref<8x8xf32, #tpu.memory_space<vmem>>, vector<8x8xf32>
    %c0_1 = arith.constant 0 : index
    %c0_2 = arith.constant 0 : index
    %1 = vector.load %arg3[%c0_1, %c0_2] : memref<8x128xf32, #tpu.memory_space<vmem>>, vector<8x128xf32>
    %cst = arith.constant dense<0.000000e+00> : vector<8x128xf32>
    %2 = tpu.matmul %0, %1, %cst {dimension_numbers = #tpu.dot_dimension_numbers<[1], [0], [0], [1], [0, 0, 1, 1], [], []>} : vector<8x8xf32>, vector<8x128xf32>, vector<8x128xf32> -> vector<8x128xf32>
    %c0_3 = arith.constant 0 : index
    %c0_4 = arith.constant 0 : index
    %3 = vector.load %arg2[%c0_3, %c0_4] : memref<8x8xf32, #tpu.memory_space<vmem>>, vector<8x8xf32>
    %c0_5 = arith.constant 0 : index
    %c0_6 = arith.constant 0 : index
    %4 = vector.load %arg4[%c0_5, %c0_6] : memref<8x128xf32, #tpu.memory_space<vmem>>, vector<8x128xf32>
    %cst_7 = arith.constant dense<0.000000e+00> : vector<8x128xf32>
    %5 = tpu.matmul %3, %4, %cst_7 {dimension_numbers = #tpu.dot_dimension_numbers<[1], [0], [0], [1], [0, 0, 1, 1], [], []>} : vector<8x8xf32>, vector<8x128xf32>, vector<8x128xf32> -> vector<8x128xf32>
    %6 = arith.addf %2, %5 : vector<8x128xf32>
    %c0_8 = arith.constant 0 : index
    %c0_9 = arith.constant 0 : index
    %7 = vector.load %arg5[%c0_8, %c0_9] : memref<1x128xf32, #tpu.memory_space<vmem>>, vector<1x128xf32>
    %8 = vector.broadcast %7 : vector<1x128xf32> to vector<8x128xf32>
    %9 = arith.addf %6, %8 : vector<8x128xf32>
    %cst_10 = arith.constant 0.000000e+00 : f32
    %10 = vector.broadcast %cst_10 : f32 to vector<8x128xf32>
    %11 = arith.maximumf %9, %10 : vector<8x128xf32>
    %c0_11 = arith.constant 0 : index
    %c0_12 = arith.constant 0 : index
    %12 = vector.load %arg6[%c0_11, %c0_12] : memref<128x128xf32, #tpu.memory_space<vmem>>, vector<128x128xf32>
    %cst_13 = arith.constant dense<0.000000e+00> : vector<8x128xf32>
    %13 = tpu.matmul %11, %12, %cst_13 {dimension_numbers = #tpu.dot_dimension_numbers<[1], [0], [0], [1], [0, 0, 1, 1], [], []>} : vector<8x128xf32>, vector<128x128xf32>, vector<8x128xf32> -> vector<8x128xf32>
    %c0_14 = arith.constant 0 : index
    %c0_15 = arith.constant 0 : index
    %14 = vector.load %arg7[%c0_14, %c0_15] : memref<1x128xf32, #tpu.memory_space<vmem>>, vector<1x128xf32>
    %15 = vector.broadcast %14 : vector<1x128xf32> to vector<8x128xf32>
    %16 = arith.addf %13, %15 : vector<8x128xf32>
    %cst_16 = arith.constant 0.000000e+00 : f32
    %17 = vector.broadcast %cst_16 : f32 to vector<8x128xf32>
    %18 = arith.maximumf %16, %17 : vector<8x128xf32>
    %c0_17 = arith.constant 0 : index
    %c0_18 = arith.constant 0 : index
    %19 = vector.load %arg8[%c0_17, %c0_18] : memref<128x16xf32, #tpu.memory_space<vmem>>, vector<128x16xf32>
    %cst_19 = arith.constant dense<0.000000e+00> : vector<8x16xf32>
    %20 = tpu.matmul %18, %19, %cst_19 {dimension_numbers = #tpu.dot_dimension_numbers<[1], [0], [0], [1], [0, 0, 1, 1], [], []>} : vector<8x128xf32>, vector<128x16xf32>, vector<8x16xf32> -> vector<8x16xf32>
    %c0_20 = arith.constant 0 : index
    %c0_21 = arith.constant 0 : index
    %21 = vector.load %arg9[%c0_20, %c0_21] : memref<1x16xf32, #tpu.memory_space<vmem>>, vector<1x16xf32>
    %22 = vector.broadcast %21 : vector<1x16xf32> to vector<8x16xf32>
    %23 = arith.addf %20, %22 : vector<8x16xf32>
    %c0_22 = arith.constant 0 : index
    %c0_23 = arith.constant 0 : index
    %24 = vector.load %arg10[%c0_22, %c0_23] : memref<8x16xf32, #tpu.memory_space<vmem>>, vector<8x16xf32>
    tpu.vector_store %arg10[%c0_22, %c0_23], %23 {strides = array<i32>} : memref<8x16xf32, #tpu.memory_space<vmem>>, vector<8x16xf32>,
    return
  }
  func.func @transform_0(%arg0: i32) -> (i32, i32) {
    %c0_i32 = arith.constant 0 : i32
    %c0_i32_0 = arith.constant 0 : i32
    return %arg0, %c0_i32 : i32, i32
  }
  func.func @transform_1(%arg0: i32) -> (i32, i32) {
    %c0_i32 = arith.constant 0 : i32
    %c0_i32_0 = arith.constant 0 : i32
    return %arg0, %c0_i32 : i32, i32
  }
  func.func @transform_2(%arg0: i32) -> (i32, i32) {
    %c0_i32 = arith.constant 0 : i32
    %c0_i32_0 = arith.constant 0 : i32
    %c0_i32_1 = arith.constant 0 : i32
    return %c0_i32, %c0_i32_0 : i32, i32
  }
  func.func @transform_3(%arg0: i32) -> (i32, i32) {
    %c0_i32 = arith.constant 0 : i32
    %c0_i32_0 = arith.constant 0 : i32
    %c0_i32_1 = arith.constant 0 : i32
    return %c0_i32, %c0_i32_0 : i32, i32
  }
  func.func @transform_4(%arg0: i32) -> (i32, i32) {
    %c0_i32 = arith.constant 0 : i32
    %c0_i32_0 = arith.constant 0 : i32
    %c0_i32_1 = arith.constant 0 : i32
    return %c0_i32, %c0_i32_0 : i32, i32
  }
  func.func @transform_5(%arg0: i32) -> (i32, i32) {
    %c0_i32 = arith.constant 0 : i32
    %c0_i32_0 = arith.constant 0 : i32
    %c0_i32_1 = arith.constant 0 : i32
    return %c0_i32, %c0_i32_0 : i32, i32
  }
  func.func @transform_6(%arg0: i32) -> (i32, i32) {
    %c0_i32 = arith.constant 0 : i32
    %c0_i32_0 = arith.constant 0 : i32
    %c0_i32_1 = arith.constant 0 : i32
    return %c0_i32, %c0_i32_0 : i32, i32
  }
  func.func @transform_7(%arg0: i32) -> (i32, i32) {
    %c0_i32 = arith.constant 0 : i32
    %c0_i32_0 = arith.constant 0 : i32
    %c0_i32_1 = arith.constant 0 : i32
    return %c0_i32, %c0_i32_0 : i32, i32
  }
  func.func @transform_8(%arg0: i32) -> (i32, i32) {
    %c0_i32 = arith.constant 0 : i32
    %c0_i32_0 = arith.constant 0 : i32
    %c0_i32_1 = arith.constant 0 : i32
    return %c0_i32, %c0_i32_0 : i32, i32
  }
  func.func @transform_9(%arg0: i32) -> (i32, i32) {
    %c0_i32 = arith.constant 0 : i32
    %c0_i32_0 = arith.constant 0 : i32
    return %arg0, %c0_i32 : i32, i32
  }
}

</mosaic_0001>

<llo_original>
// kernel: tpu_custom_call.1
$region0: #{tpu_custom_call.1}
  #allocation0 [shape = 'u32[]', space=smem, size = 0x4, offset = 0x4, fixed_abs, tag = 'smem constant byte address 0x4 - core index']
  #allocation1 [shape = 'u32[72,128]{1,0:T(1,128)}', space=vmem, size = 0x9000, scoped, tag = 'internal scratch']
  %s0 = inlined_call_operand.vmem [shape: f32[8,8], index: 0, kind: input, shape index: {}]
  %s1 = inlined_call_operand.vmem [shape: f32[8,8], index: 1, kind: input, shape index: {}]
  %s2 = inlined_call_operand.hbm [shape: f32[8,128], index: 2, kind: input, shape index: {}]
  %s3 = inlined_call_operand.hbm [shape: f32[8,128], index: 3, kind: input, shape index: {}]
  %s4 = inlined_call_operand.vmem [shape: f32[1,128], index: 4, kind: input, shape index: {}]
  %s5 = inlined_call_operand.vmem [shape: f32[128,128], index: 5, kind: input, shape index: {}]
  %s6 = inlined_call_operand.vmem [shape: f32[1,128], index: 6, kind: input, shape index: {}]
  %s7 = inlined_call_operand.vmem [shape: f32[128,16], index: 7, kind: input, shape index: {}]
  %s8 = inlined_call_operand.vmem [shape: f32[1,16], index: 8, kind: input, shape index: {}]
  %s9 = inlined_call_operand.hbm [shape: f32[8,16], index: 9, kind: output, shape index: {}]
  %s10 = sld [smem:[#allocation0]]
  $region54: #{tpu_custom_call.1} parent=0
    _
  %s12 = ssub.s32 1, %s10
  %s13 = scalar_select 0, %s12, %s10
  $region1: #{tpu_custom_call.1} parent=0
    #allocation2 [shape = 'u8[4096]{0}', space=vmem, size = 0x1000, scoped, tag = 'input window, operand 2, single buffered']
    #allocation3 [shape = 's32[1]{0}', space=sflag, size = 0x4, scoped, tag = 'scoped memory for tpu_custom_call.1']
    #allocation4 [shape = 's32[1]{0}', space=sflag, size = 0x4, scoped, tag = 'scoped memory for tpu_custom_call.1']
    #allocation5 [shape = 'u8[4096]{0}', space=vmem, size = 0x1000, scoped, tag = 'input window, operand 3, single buffered']
    #allocation6 [shape = 's32[1]{0}', space=sflag, size = 0x4, scoped, tag = 'scoped memory for tpu_custom_call.1']
    #allocation7 [shape = 'u8[4096]{0}', space=vmem, size = 0x1000, scoped, tag = 'output window, operand 0, single buffered']
    %14 = vsyncpa [#allocation3], 0
    %15 = vsyncpa [#allocation6], 0
    %16 = vsyncpa [#allocation4], 0
    // Predicated region
    $region2: #{tpu_custom_call.1} parent=1 // pred_check
      _
    $region3: #{tpu_custom_call.1} parent=1 // pred_check_branch
      %18 = sbr.rel (0) target = $region5
    $region4: #{tpu_custom_call.1} parent=1 // pred_region
      _
    $region5: #{tpu_custom_call.1} parent=1 // pred_fallthru
      _
    // Predicated region
    $region6: #{tpu_custom_call.1} parent=1 // pred_check
      _
    $region7: #{tpu_custom_call.1} parent=1 // pred_check_branch
      %20 = sbr.rel (0) target = $region9
    $region8: #{tpu_custom_call.1} parent=1 // pred_region
      _
    $region9: #{tpu_custom_call.1} parent=1 // pred_fallthru
      _
    // Predicated region
    $region10: #{tpu_custom_call.1} parent=1 // pred_check
      _
    $region11: #{tpu_custom_call.1} parent=1 // pred_check_branch
      %22 = sbr.rel (0) target = $region13
    $region12: #{tpu_custom_call.1} parent=1 // pred_region
      %24 = vsyncadd [#allocation3], 0
      %s26 = sshll.u32 %s2, 4
      %s27 = int_to_ptr.hbm [resolvable:$true] %s26
      %s28 = sshll.u32 [#allocation2], 4
      %s29 = int_to_ptr.vmem [resolvable:$true] %s28
      %31 = dma.hbm_to_vmem [thread:$0]  %s27, 128, %s29, [#allocation3]
    $region13: #{tpu_custom_call.1} parent=1 // pred_fallthru
      _
    // Predicated region
    $region14: #{tpu_custom_call.1} parent=1 // pred_check
      _
    $region15: #{tpu_custom_call.1} parent=1 // pred_check_branch
      %33 = sbr.rel (0) target = $region17
    $region16: #{tpu_custom_call.1} parent=1 // pred_region
      %35 = vsyncadd [#allocation6], 0
      %s37 = sshll.u32 %s3, 4
      %s38 = int_to_ptr.hbm [resolvable:$true] %s37
      %s39 = sshll.u32 [#allocation5], 4
      %s40 = int_to_ptr.vmem [resolvable:$true] %s39
      %42 = dma.hbm_to_vmem [thread:$0]  %s38, 128, %s40, [#allocation6]
    $region17: #{tpu_custom_call.1} parent=1 // pred_fallthru
      _
    // Predicated region
    $region18: #{tpu_custom_call.1} parent=1 // pred_check
      _
    $region19: #{tpu_custom_call.1} parent=1 // pred_check_branch
      %44 = sbr.rel (0) target = $region21
    $region20: #{tpu_custom_call.1} parent=1 // pred_region
      _
    $region21: #{tpu_custom_call.1} parent=1 // pred_fallthru
      _
    // Predicated region
    $region22: #{tpu_custom_call.1} parent=1 // pred_check
      _
    $region23: #{tpu_custom_call.1} parent=1 // pred_check_branch
      %46 = sbr.rel (0) target = $region25
    $region24: #{tpu_custom_call.1} parent=1 // pred_region
      _
    $region25: #{tpu_custom_call.1} parent=1 // pred_fallthru
      _
    // Predicated region
    $region26: #{tpu_custom_call.1} parent=1 // pred_check
      _
    $region27: #{tpu_custom_call.1} parent=1 // pred_check_branch
      %48 = sbr.rel (0) target = $region29
    $region28: #{tpu_custom_call.1} parent=1 // pred_region
      _
    $region29: #{tpu_custom_call.1} parent=1 // pred_fallthru
      _
    // Predicated region
    $region30: #{tpu_custom_call.1} parent=1 // pred_check
      _
    $region31: #{tpu_custom_call.1} parent=1 // pred_check_branch
      %50 = sbr.rel (0) target = $region33
    $region32: #{tpu_custom_call.1} parent=1 // pred_region
      _
    $region33: #{tpu_custom_call.1} parent=1 // pred_fallthru
      _
    // Predicated region
    $region34: #{tpu_custom_call.1} parent=1 // pred_check
      _
    $region35: #{tpu_custom_call.1} parent=1 // pred_check_branch
      %52 = sbr.rel (0) target = $region37
    $region36: #{tpu_custom_call.1} parent=1 // pred_region
      _
    $region37: #{tpu_custom_call.1} parent=1 // pred_fallthru
      _
    // Predicated region
    $region38: #{tpu_custom_call.1} parent=1 // pred_check
      _
    $region39: #{tpu_custom_call.1} parent=1 // pred_check_branch
      %54 = sbr.rel (0) target = $region41
    $region40: #{tpu_custom_call.1} parent=1 // pred_region
      %56 = dma.done [#allocation3], 128
    $region41: #{tpu_custom_call.1} parent=1 // pred_fallthru
      _
    // Predicated region
    $region42: #{tpu_custom_call.1} parent=1 // pred_check
      _
    $region43: #{tpu_custom_call.1} parent=1 // pred_check_branch
      %58 = sbr.rel (0) target = $region45
    $region44: #{tpu_custom_call.1} parent=1 // pred_region
      %60 = dma.done [#allocation6], 128
    $region45: #{tpu_custom_call.1} parent=1 // pred_fallthru
      _
    %v61 = vld [vmem:[%s0] sm:$0xff]
    %v62 = vld [vmem:[#allocation2] sm:$0xff]
    %v63 = vld [vmem:[%s1] sm:$0xff]
    %v64 = vld [vmem:[#allocation5] sm:$0xff]
    %vm65 = vcmask 64512
    %v67 = vsel %vm65, %v63, 0
    %69 = vmatpush.msra.mxu0 0.0
    %70 = vmatpush.msra.mxu0 0.0
    %71 = vmatpush.msra.mxu0 0.0
    %72 = vmatpush.msra.mxu0 0.0
    %73 = vmatpush.msra.mxu0 0.0
    %74 = vmatpush.msra.mxu0 0.0
    %75 = vmatpush.msra.mxu0 0.0
    %76 = vmatpush.msra.mxu0 0.0
    %77 = vmatpush.msra.mxu0 0.0
    %78 = vmatpush.msra.mxu0 0.0
    %79 = vmatpush.msra.mxu0 0.0
    %80 = vmatpush.msra.mxu0 0.0
    %81 = vmatpush.msra.mxu0 0.0
    %82 = vmatpush.msra.mxu0 0.0
    %83 = vmatpush.msra.mxu0 0.0
    %84 = vmatpush.msra.mxu0 %v64
    %85 = vmatmul.f32.gmra.mxu0 %v67
    %v86 = vpop.f32.mrf.mxu0
    %v87 = vadd.f32 0.0, %v86
    %88 = vdwg.mxu0
    %v90 = vsel %vm65, %v61, 0
    %92 = vmatpush.msra.mxu0 0.0
    %93 = vmatpush.msra.mxu0 0.0
    %94 = vmatpush.msra.mxu0 0.0
    %95 = vmatpush.msra.mxu0 0.0
    %96 = vmatpush.msra.mxu0 0.0
    %97 = vmatpush.msra.mxu0 0.0
    %98 = vmatpush.msra.mxu0 0.0
    %99 = vmatpush.msra.mxu0 0.0
    %100 = vmatpush.msra.mxu0 0.0
    %101 = vmatpush.msra.mxu0 0.0
    %102 = vmatpush.msra.mxu0 0.0
    %103 = vmatpush.msra.mxu0 0.0
    %104 = vmatpush.msra.mxu0 0.0
    %105 = vmatpush.msra.mxu0 0.0
    %106 = vmatpush.msra.mxu0 0.0
    %107 = vmatpush.msra.mxu0 %v62
    %108 = vmatmul.f32.gmra.mxu0 %v90
    %v109 = vpop.f32.mrf.mxu0
    %v110 = vadd.f32 %v87, %v109
    %111 = vdwg.mxu0
    %v112 = vld [vmem:[%s4] sm:$0x1]
    %v114 = vperm.slane %v112, 0
    %v116 = vadd.f32 %v110, %v114
    %v117 = vmax.f32 %v116, 0.0
    %v118 = vld [vmem:[%s5] sm:$0xff]
    %v119 = vld [vmem:[%s5 + $0x8] sm:$0xff]
    %v120 = vld [vmem:[%s5 + $0x10] sm:$0xff]
    %v121 = vld [vmem:[%s5 + $0x18] sm:$0xff]
    %v122 = vld [vmem:[%s5 + $0x20] sm:$0xff]
    %v123 = vld [vmem:[%s5 + $0x28] sm:$0xff]
    %v124 = vld [vmem:[%s5 + $0x30] sm:$0xff]
    %v125 = vld [vmem:[%s5 + $0x38] sm:$0xff]
    %v126 = vld [vmem:[%s5 + $0x40] sm:$0xff]
    %v127 = vld [vmem:[%s5 + $0x48] sm:$0xff]
    %v128 = vld [vmem:[%s5 + $0x50] sm:$0xff]
    %v129 = vld [vmem:[%s5 + $0x58] sm:$0xff]
    %v130 = vld [vmem:[%s5 + $0x60] sm:$0xff]
    %v131 = vld [vmem:[%s5 + $0x68] sm:$0xff]
    %v132 = vld [vmem:[%s5 + $0x70] sm:$0xff]
    %v133 = vld [vmem:[%s5 + $0x78] sm:$0xff]
    %v134 = vld [vmem:[%s6] sm:$0x1]
    %v136 = vperm.slane %v134, 0
    %138 = vmatpush.msra.mxu0 %v133
    %139 = vmatpush.msra.mxu0 %v132
    %140 = vmatpush.msra.mxu0 %v131
    %141 = vmatpush.msra.mxu0 %v130
    %142 = vmatpush.msra.mxu0 %v129
    %143 = vmatpush.msra.mxu0 %v128
    %144 = vmatpush.msra.mxu0 %v127
    %145 = vmatpush.msra.mxu0 %v126
    %146 = vmatpush.msra.mxu0 %v125
    %147 = vmatpush.msra.mxu0 %v124
    %148 = vmatpush.msra.mxu0 %v123
    %149 = vmatpush.msra.mxu0 %v122
    %150 = vmatpush.msra.mxu0 %v121
    %151 = vmatpush.msra.mxu0 %v120
    %152 = vmatpush.msra.mxu0 %v119
    %153 = vmatpush.msra.mxu0 %v118
    %154 = vmatmul.f32.gmra.mxu0 %v117
    %v155 = vpop.f32.mrf.mxu0
    %v156 = vadd.f32 %v136, %v155
    %157 = vdwg.mxu0
    %v158 = vmax.f32 %v156, 0.0
    %v159 = vld [vmem:[%s7] sm:$0xff]
    %v160 = vld [vmem:[%s7 + $0x8] sm:$0xff]
    %v161 = vld [vmem:[%s7 + $0x10] sm:$0xff]
    %v162 = vld [vmem:[%s7 + $0x18] sm:$0xff]
    %v163 = vld [vmem:[%s7 + $0x20] sm:$0xff]
    %v164 = vld [vmem:[%s7 + $0x28] sm:$0xff]
    %v165 = vld [vmem:[%s7 + $0x30] sm:$0xff]
    %v166 = vld [vmem:[%s7 + $0x38] sm:$0xff]
    %v167 = vld [vmem:[%s7 + $0x40] sm:$0xff]
    %v168 = vld [vmem:[%s7 + $0x48] sm:$0xff]
    %v169 = vld [vmem:[%s7 + $0x50] sm:$0xff]
    %v170 = vld [vmem:[%s7 + $0x58] sm:$0xff]
    %v171 = vld [vmem:[%s7 + $0x60] sm:$0xff]
    %v172 = vld [vmem:[%s7 + $0x68] sm:$0xff]
    %v173 = vld [vmem:[%s7 + $0x70] sm:$0xff]
    %v174 = vld [vmem:[%s7 + $0x78] sm:$0xff]
    %v175 = vld [vmem:[%s8] sm:$0x1]
    %v177 = vperm.slane %v175, 0
    %179 = vmatpush.msra.mxu0 %v174
    %180 = vmatpush.msra.mxu0 %v173
    %181 = vmatpush.msra.mxu0 %v172
    %182 = vmatpush.msra.mxu0 %v171
    %183 = vmatpush.msra.mxu0 %v170
    %184 = vmatpush.msra.mxu0 %v169
    %185 = vmatpush.msra.mxu0 %v168
    %186 = vmatpush.msra.mxu0 %v167
    %187 = vmatpush.msra.mxu0 %v166
    %188 = vmatpush.msra.mxu0 %v165
    %189 = vmatpush.msra.mxu0 %v164
    %190 = vmatpush.msra.mxu0 %v163
    %191 = vmatpush.msra.mxu0 %v162
    %192 = vmatpush.msra.mxu0 %v161
    %193 = vmatpush.msra.mxu0 %v160
    %194 = vmatpush.msra.mxu0 %v159
    %195 = vmatmul.f32.gmra.mxu0 %v158
    %v196 = vpop.f32.mrf.mxu0
    %v197 = vadd.f32 %v177, %v196
    %198 = vdwg.mxu0
    %vm199 = vcmask 130048
    %200 = vst.msk [vmem:[#allocation7] sm:$0xff] %vm199, %v197
    // Predicated region
    $region46: #{tpu_custom_call.1} parent=1 // pred_check
      _
    $region47: #{tpu_custom_call.1} parent=1 // pred_check_branch
      %202 = sbr.rel (0) target = $region49
    $region48: #{tpu_custom_call.1} parent=1 // pred_region
      %204 = vsyncadd [#allocation4], 0
      %s206 = sshll.u32 [#allocation7], 4
      %s207 = int_to_ptr.vmem [resolvable:$true] %s206
      %s208 = sshll.u32 %s9, 4
      %s209 = int_to_ptr.hbm [resolvable:$true] %s208
      %211 = dma.vmem_to_hbm [thread:$0]  %s207, 128, %s209, [#allocation4]
    $region49: #{tpu_custom_call.1} parent=1 // pred_fallthru
      _
    // Predicated region
    $region50: #{tpu_custom_call.1} parent=1 // pred_check
      _
    $region51: #{tpu_custom_call.1} parent=1 // pred_check_branch
      %213 = sbr.rel (0) target = $region53
    $region52: #{tpu_custom_call.1} parent=1 // pred_region
      %215 = dma.done [#allocation4], 128
    $region53: #{tpu_custom_call.1} parent=1 // pred_fallthru
      _
    %216 = vsyncpa [#allocation3], 1
    %217 = vsyncpa [#allocation6], 1
    %218 = vsyncpa [#allocation4], 1

</llo_original>
